<compile_context>
chip_gen: v7x
topology: tpu7x:2x2x1
jax: 0.10.0
libtpu: 0.0.40
codegen_flags: <defaults>
</compile_context>

<pallas_src>
import functools

import jax
import jax.numpy as jnp
from jax import lax
from jax.experimental import pallas as pl
from jax.experimental.pallas import tpu as pltpu

EPS = 1e-3      # matches nn.BatchNorm2d(eps=0.001)
LANE = 128
SUBLANE = 8


def _round_up(x, m):
    return (x + m - 1) // m * m


# ------------- Pass 1: conv-as-GEMM + per-tile per-channel partial stats -------------
def _gemm_stats_kernel(x_ref, w_ref, y_ref, stats_ref):
    # x_ref:     (TM, Kpad)   bf16 im2col patches (zero-padded)
    # w_ref:     (Kpad, Cpad) bf16 folded conv weights (zero-padded)
    # y_ref:     (TM, Cpad)   f32 conv output tile
    # stats_ref: (8, Cpad)    f32 per-tile stats slab: row0 = sum, row1 = sum of squares
    y = jnp.dot(x_ref[...], w_ref[...], preferred_element_type=jnp.float32)  # MXU
    y_ref[...] = y
    s = jnp.sum(y, axis=0, keepdims=True)
    ss = jnp.sum(y * y, axis=0, keepdims=True)
    pad = jnp.zeros((SUBLANE - 2, y.shape[1]), jnp.float32)
    stats_ref[...] = jnp.concatenate([s, ss, pad], axis=0)   # full-tile, unmasked store


# ------------- Pass 2: fused BatchNorm (scale/shift FMA) + ReLU -------------
def _bn_relu_kernel(y_ref, scale_ref, shift_ref, o_ref):
    # y_ref: (TM, Cpad) f32 ; scale_ref/shift_ref: (1, Cpad) f32 ; o_ref: (TM, Cpad)
    o_ref[...] = jnp.maximum(
        y_ref[...] * scale_ref[...] + shift_ref[...], 0.0
    ).astype(o_ref.dtype)


def _im2col_nchw(x_nchw, k, stride, pad):
    """Extract conv patches. Returns (N*Hout*Wout, k*k*Cin), Hout, Wout."""
    n, cin, h, w = x_nchw.shape
    x = jnp.transpose(x_nchw, (0, 2, 3, 1))                        # NHWC
    x = jnp.pad(x, ((0, 0), (pad, pad), (pad, pad), (0, 0)))
    hout = (h + 2 * pad - k) // stride + 1
    wout = (w + 2 * pad - k) // stride + 1
    patches = []
    for kh in range(k):
        for kw in range(k):
            patches.append(
                x[:, kh:kh + stride * hout:stride, kw:kw + stride * wout:stride, :]
            )
    p = jnp.stack(patches, axis=3)                                 # (N,Hout,Wout,k*k,Cin)
    return p.reshape(n * hout * wout, k * k * cin), hout, wout


@functools.partial(jax.jit,
                   static_argnames=("kernel_size", "stride", "padding", "tm"))
def basic_conv2d(x_nchw, conv_w, gamma, beta, *, kernel_size, stride, padding, tm=256):
    """Forward pass of BasicConv2d. x_nchw: (N,Cin,H,W), conv_w: (Cout,Cin,k,k)."""
    n, cin, h, w = x_nchw.shape
    cout = conv_w.shape[0]
    k = kernel_size
    compute_dtype = jnp.bfloat16          # bf16 MXU feed, f32 accumulation / BN math

    patches, hout, wout = _im2col_nchw(x_nchw, k, stride, padding)
    rows, kdim = patches.shape
    kpad = _round_up(kdim, LANE)          # lane-dense contraction dim
    cpad = _round_up(cout, LANE)          # lane-dense output dim
    rows_p = _round_up(rows, tm)
    num_tiles = rows_p // tm

    # Zero padding is exact: padded rows/cols contribute 0 to the GEMM and to sum/sumsq.
    patches_p = jnp.pad(
        patches, ((0, rows_p - rows), (0, kpad - kdim))).astype(compute_dtype)
    w_mat = jnp.transpose(conv_w, (2, 3, 1, 0)).reshape(k * k * cin, cout)
    w_p = jnp.pad(w_mat, ((0, kpad - kdim), (0, cpad - cout))).astype(compute_dtype)

    # ---- Pass 1: tiled GEMM (pipelined, megacore-parallel) + per-tile channel stats ----
    y_p, partial_stats = pl.pallas_call(
        _gemm_stats_kernel,
        out_shape=(
            jax.ShapeDtypeStruct((rows_p, cpad), jnp.float32),
            jax.ShapeDtypeStruct((num_tiles * SUBLANE, cpad), jnp.float32),
        ),
        grid_spec=pltpu.PrefetchScalarGridSpec(
            num_scalar_prefetch=0,
            grid=(num_tiles,),
            in_specs=[
                pl.BlockSpec((tm, kpad), lambda i: (i, 0)),
                pl.BlockSpec((kpad, cpad), lambda i: (0, 0)),
            ],
            out_specs=(
                pl.BlockSpec((tm, cpad), lambda i: (i, 0)),
                pl.BlockSpec((SUBLANE, cpad), lambda i: (i, 0)),
            ),
        ),
        compiler_params=pltpu.CompilerParams(
            dimension_semantics=("parallel",)),
    )(patches_p, w_p)

    # ---- Tiny O(C) reduction of per-tile partials + BN scale/shift derivation ----
    stats = partial_stats.reshape(num_tiles, SUBLANE, cpad).sum(axis=0)
    inv_r = 1.0 / rows                                         # TRUE rows, not padded
    mean = stats[0] * inv_r
    var = jnp.maximum(stats[1] * inv_r - mean * mean, 0.0)     # biased var (train mode)
    gamma_p = jnp.pad(gamma.astype(jnp.float32), (0, cpad - cout))   # padded gamma=0
    beta_p = jnp.pad(beta.astype(jnp.float32), (0, cpad - cout))     # padded beta=0
    scale_v = gamma_p * lax.rsqrt(var + EPS)
    shift_v = beta_p - mean * scale_v
    scale = scale_v.reshape(1, cpad)
    shift = shift_v.reshape(1, cpad)

    # ---- Pass 2: fused scale/shift + ReLU over the same row tiling ("parallel") ----
    out_p = pl.pallas_call(
        _bn_relu_kernel,
        out_shape=jax.ShapeDtypeStruct((rows_p, cpad), x_nchw.dtype),
        grid_spec=pltpu.PrefetchScalarGridSpec(
            num_scalar_prefetch=0,
            grid=(num_tiles,),
            in_specs=[
                pl.BlockSpec((tm, cpad), lambda i: (i, 0)),
                pl.BlockSpec((1, cpad), lambda i: (0, 0)),
                pl.BlockSpec((1, cpad), lambda i: (0, 0)),
            ],
            out_specs=pl.BlockSpec((tm, cpad), lambda i: (i, 0)),
        ),
        compiler_params=pltpu.CompilerParams(
            dimension_semantics=("parallel",)),
    )(y_p, scale, shift)

    # Slice off padding, back to NCHW.
    out = out_p[:rows, :cout].reshape(n, hout, wout, cout)
    return jnp.transpose(out, (0, 3, 1, 2))


def _reference(x_nchw, conv_w, gamma, beta, *, stride, padding):
    """Pure-JAX f32 reference mirroring PyTorch train-mode forward."""
    y = lax.conv_general_dilated(
        x_nchw, conv_w,
        window_strides=(stride, stride),
        padding=[(padding, padding), (padding, padding)],
        dimension_numbers=("NCHW", "OIHW", "NCHW"),
    )
    mean = jnp.mean(y, axis=(0, 2, 3), keepdims=True)
    var = jnp.mean((y - mean) ** 2, axis=(0, 2, 3), keepdims=True)  # biased
    yhat = (y - mean) / jnp.sqrt(var + EPS)
    out = yhat * gamma.reshape(1, -1, 1, 1) + beta.reshape(1, -1, 1, 1)
    return jnp.maximum(out, 0.0)


if __name__ == "__main__":
    # BasicConv2d(in_planes=4, out_planes=8, kernel_size=3, stride=1, padding=1)
    N, CIN, H, W = 2, 4, 16, 16
    COUT, K, STRIDE, PAD = 8, 3, 1, 1

    key = jax.random.PRNGKey(0)
    kx, kw, kg, kb = jax.random.split(key, 4)
    x = jax.random.normal(kx, (N, CIN, H, W), dtype=jnp.float32)
    conv_w = jax.random.normal(kw, (COUT, CIN, K, K), dtype=jnp.float32) * 0.1
    gamma = 1.0 + 0.1 * jax.random.normal(kg, (COUT,), dtype=jnp.float32)
    beta = 0.1 * jax.random.normal(kb, (COUT,), dtype=jnp.float32)

    out = basic_conv2d(x, conv_w, gamma, beta,
                       kernel_size=K, stride=STRIDE, padding=PAD)
    out = jax.block_until_ready(out)

    ref = _reference(x, conv_w, gamma, beta, stride=STRIDE, padding=PAD)
    assert out.shape == (N, COUT, H, W), out.shape
    max_err = float(jnp.max(jnp.abs(out - ref)))
    # bf16 MXU feed -> ~1e-3 absolute error after BN normalization; loose bound below.
    assert max_err < 3e-2, max_err
    print("KERNEL_OK")
</pallas_src>

<mosaic_0001>
module attributes {stable_mosaic.version = 11 : i64} {
  func.func @_gemm_stats_kernel(%arg0: i32, %arg1: memref<256x128xbf16, #tpu.memory_space<vmem>>, %arg2: memref<128x128xbf16, #tpu.memory_space<vmem>>, %arg3: memref<256x128xf32, #tpu.memory_space<vmem>>, %arg4: memref<8x128xf32, #tpu.memory_space<vmem>>) attributes {dimension_semantics = [#tpu.dimension_semantics<parallel>], iteration_bounds = array<i64: 2>, scalar_prefetch = 0 : i64, scratch_operands = 0 : i64, tpu.core_type = #tpu.core_type<tc>, window_params = [{transform_indices = @transform_0, window_bounds = array<i64: 256, 128>}, {pipeline_mode = #tpu.pipeline_mode<synchronous>, transform_indices = @transform_1, window_bounds = array<i64: 128, 128>}, {transform_indices = @transform_2, window_bounds = array<i64: 256, 128>}, {transform_indices = @transform_3, window_bounds = array<i64: 8, 128>}]} {
    %c0 = arith.constant 0 : index
    %c0_0 = arith.constant 0 : index
    %0 = vector.load %arg1[%c0, %c0_0] : memref<256x128xbf16, #tpu.memory_space<vmem>>, vector<256x128xbf16>
    %c0_1 = arith.constant 0 : index
    %c0_2 = arith.constant 0 : index
    %1 = vector.load %arg2[%c0_1, %c0_2] : memref<128x128xbf16, #tpu.memory_space<vmem>>, vector<128x128xbf16>
    %cst = arith.constant dense<0.000000e+00> : vector<256x128xf32>
    %2 = tpu.matmul %0, %1, %cst {dimension_numbers = #tpu.dot_dimension_numbers<[1], [0], [0], [1], [0, 0, 1, 1], [], []>} : vector<256x128xbf16>, vector<128x128xbf16>, vector<256x128xf32> -> vector<256x128xf32>
    %c0_3 = arith.constant 0 : index
    %c0_4 = arith.constant 0 : index
    %3 = vector.load %arg3[%c0_3, %c0_4] : memref<256x128xf32, #tpu.memory_space<vmem>>, vector<256x128xf32>
    tpu.vector_store %arg3[%c0_3, %c0_4], %2 {strides = array<i32>} : memref<256x128xf32, #tpu.memory_space<vmem>>, vector<256x128xf32>,
    %cst_5 = arith.constant dense<0.000000e+00> : vector<128xf32>
    %4 = vector.multi_reduction <add>, %2, %cst_5 [0] : vector<256x128xf32> to vector<128xf32>
    %5 = vector.shape_cast %4 : vector<128xf32> to vector<1x128xf32>
    %6 = arith.mulf %2, %2 : vector<256x128xf32>
    %cst_6 = arith.constant dense<0.000000e+00> : vector<128xf32>
    %7 = vector.multi_reduction <add>, %6, %cst_6 [0] : vector<256x128xf32> to vector<128xf32>
    %8 = vector.shape_cast %7 : vector<128xf32> to vector<1x128xf32>
    %cst_7 = arith.constant 0.000000e+00 : f32
    %9 = vector.broadcast %cst_7 : f32 to vector<6x128xf32>
    %10 = tpu.concatenate %5, %8, %9 in 0 : vector<1x128xf32>, vector<1x128xf32>, vector<6x128xf32> -> vector<8x128xf32>
    %c0_8 = arith.constant 0 : index
    %c0_9 = arith.constant 0 : index
    %11 = vector.load %arg4[%c0_8, %c0_9] : memref<8x128xf32, #tpu.memory_space<vmem>>, vector<8x128xf32>
    tpu.vector_store %arg4[%c0_8, %c0_9], %10 {strides = array<i32>} : memref<8x128xf32, #tpu.memory_space<vmem>>, vector<8x128xf32>,
    return
  }
  func.func @transform_0(%arg0: i32) -> (i32, i32) {
    %c0_i32 = arith.constant 0 : i32
    %c0_i32_0 = arith.constant 0 : i32
    return %arg0, %c0_i32 : i32, i32
  }
  func.func @transform_1(%arg0: i32) -> (i32, i32) {
    %c0_i32 = arith.constant 0 : i32
    %c0_i32_0 = arith.constant 0 : i32
    %c0_i32_1 = arith.constant 0 : i32
    return %c0_i32, %c0_i32_0 : i32, i32
  }
  func.func @transform_2(%arg0: i32) -> (i32, i32) {
    %c0_i32 = arith.constant 0 : i32
    %c0_i32_0 = arith.constant 0 : i32
    return %arg0, %c0_i32 : i32, i32
  }
  func.func @transform_3(%arg0: i32) -> (i32, i32) {
    %c0_i32 = arith.constant 0 : i32
    %c0_i32_0 = arith.constant 0 : i32
    return %arg0, %c0_i32 : i32, i32
  }
}

module attributes {stable_mosaic.version = 11 : i64} {
  func.func @_bn_relu_kernel(%arg0: i32, %arg1: memref<256x128xf32, #tpu.memory_space<vmem>>, %arg2: memref<1x128xf32, #tpu.memory_space<vmem>>, %arg3: memref<1x128xf32, #tpu.memory_space<vmem>>, %arg4: memref<256x128xf32, #tpu.memory_space<vmem>>) attributes {dimension_semantics = [#tpu.dimension_semantics<parallel>], iteration_bounds = array<i64: 2>, scalar_prefetch = 0 : i64, scratch_operands = 0 : i64, tpu.core_type = #tpu.core_type<tc>, window_params = [{transform_indices = @transform_0, window_bounds = array<i64: 256, 128>}, {pipeline_mode = #tpu.pipeline_mode<synchronous>, transform_indices = @transform_1, window_bounds = array<i64: 1, 128>}, {pipeline_mode = #tpu.pipeline_mode<synchronous>, transform_indices = @transform_2, window_bounds = array<i64: 1, 128>}, {transform_indices = @transform_3, window_bounds = array<i64: 256, 128>}]} {
    %c0 = arith.constant 0 : index
    %c0_0 = arith.constant 0 : index
    %0 = vector.load %arg1[%c0, %c0_0] : memref<256x128xf32, #tpu.memory_space<vmem>>, vector<256x128xf32>
    %c0_1 = arith.constant 0 : index
    %c0_2 = arith.constant 0 : index
    %1 = vector.load %arg2[%c0_1, %c0_2] : memref<1x128xf32, #tpu.memory_space<vmem>>, vector<1x128xf32>
    %2 = vector.broadcast %1 : vector<1x128xf32> to vector<256x128xf32>
    %3 = arith.mulf %0, %2 : vector<256x128xf32>
    %c0_3 = arith.constant 0 : index
    %c0_4 = arith.constant 0 : index
    %4 = vector.load %arg3[%c0_3, %c0_4] : memref<1x128xf32, #tpu.memory_space<vmem>>, vector<1x128xf32>
    %5 = vector.broadcast %4 : vector<1x128xf32> to vector<256x128xf32>
    %6 = arith.addf %3, %5 : vector<256x128xf32>
    %cst = arith.constant 0.000000e+00 : f32
    %7 = vector.broadcast %cst : f32 to vector<256x128xf32>
    %8 = arith.maximumf %6, %7 : vector<256x128xf32>
    %c0_5 = arith.constant 0 : index
    %c0_6 = arith.constant 0 : index
    %9 = vector.load %arg4[%c0_5, %c0_6] : memref<256x128xf32, #tpu.memory_space<vmem>>, vector<256x128xf32>
    tpu.vector_store %arg4[%c0_5, %c0_6], %8 {strides = array<i32>} : memref<256x128xf32, #tpu.memory_space<vmem>>, vector<256x128xf32>,
    return
  }
  func.func @transform_0(%arg0: i32) -> (i32, i32) {
    %c0_i32 = arith.constant 0 : i32
    %c0_i32_0 = arith.constant 0 : i32
    return %arg0, %c0_i32 : i32, i32
  }
  func.func @transform_1(%arg0: i32) -> (i32, i32) {
    %c0_i32 = arith.constant 0 : i32
    %c0_i32_0 = arith.constant 0 : i32
    %c0_i32_1 = arith.constant 0 : i32
    return %c0_i32, %c0_i32_0 : i32, i32
  }
  func.func @transform_2(%arg0: i32) -> (i32, i32) {
    %c0_i32 = arith.constant 0 : i32
    %c0_i32_0 = arith.constant 0 : i32
    %c0_i32_1 = arith.constant 0 : i32
    return %c0_i32, %c0_i32_0 : i32, i32
  }
  func.func @transform_3(%arg0: i32) -> (i32, i32) {
    %c0_i32 = arith.constant 0 : i32
    %c0_i32_0 = arith.constant 0 : i32
    return %arg0, %c0_i32 : i32, i32
  }
}

</mosaic_0001>

<llo_original>
// kernel: basic_conv2d.3
$region0: #{basic_conv2d.3}
  #allocation0 [shape = 'u32[]', space=smem, size = 0x4, offset = 0x4, fixed_abs, tag = 'smem constant byte address 0x4 - core index']
  #allocation1 [shape = 'u32[144,128]{1,0:T(1,128)}', space=vmem, size = 0x12000, scoped, tag = 'internal scratch']
  %s0 = inlined_call_operand.vmem [shape: f32[512,128], index: 0, kind: input, shape index: {}]
  %s1 = inlined_call_operand.vmem [shape: f32[1,128], index: 1, kind: input, shape index: {}]
  %s2 = inlined_call_operand.vmem [shape: f32[1,128], index: 2, kind: input, shape index: {}]
  %s3 = inlined_call_operand.vmem [shape: f32[512,128], index: 3, kind: output, shape index: {}]
  %s4 = sld [smem:[#allocation0]]
  $region45: #{basic_conv2d.3} parent=0
    _
  %s6 = ssub.s32 1, %s4
  %s7 = scalar_select 0, %s6, %s4
  loop: start=0, step=1, limit=4
  $region2: #{basic_conv2d.3} parent=0 // loop_pre_header
    _
  $region3: #{basic_conv2d.3} parent=0 // loop_header
    %s9 = sphi 0, %s13
    %p10 = scmp.ge.s32.totalorder %s9, 4
    %s19 = sphi 0, %s21
    %s22 = sphi 0, %s19
    %s23 = sphi 0, %s22
    %s39 = sphi 0, %s23
    %s43 = sphi 0, %s43
    %s45 = sphi 0, %s43
    %s46 = sphi 0, %s45
    %s60 = sphi 0, %s46
    %s64 = sphi 0, %s64
    %s66 = sphi 0, %s64
    %s67 = sphi 0, %s66
    %s81 = sphi 0, %s67
    %s87 = sphi 0, %s89
    %s90 = sphi 0, %s87
    %s91 = sphi 0, %s90
    %s107 = sphi 0, %s91
  $region4: #{basic_conv2d.3} parent=0 // loop_header_branch
    %12 = sbr.rel (%p10) target = $region8
  $region5: #{basic_conv2d.3} parent=0 // loop_body
    %s14 = ssub.s32 %s9, 1
    %s15 = ssub.s32 %s9, 2
    %s16 = sadd.s32 %s9, 1
    %s17 = ssub.s32 %s9, %s16
    %p18 = scmp.eq.s32.totalorder %s17, 0
    %s20 = sadd.s32 %s19, 1
    %s21 = scalar_select %p18, %s19, %s20
    %p24 = pneg %p18
    %p25 = scmp.eq.s32.totalorder %s9, 1
    %p26 = por %p24, %p25
    %p27 = scmp.ne.s32.totalorder %s19, %s22
    %p28 = scmp.eq.s32.totalorder %s9, 0
    %p29 = por %p27, %p28
    %p30 = scmp.ne.s32.totalorder %s19, %s22
    %p31 = scmp.eq.s32.totalorder %s14, 1
    %p32 = por %p30, %p31
    %p33 = scmp.ne.s32.totalorder %s22, %s23
    %p34 = scmp.eq.s32.totalorder %s14, 0
    %p35 = por %p33, %p34
    %p36 = scmp.ne.s32.totalorder %s22, %s23
    %p37 = scmp.eq.s32.totalorder %s15, 1
    %p38 = por %p36, %p37
    %p40 = scmp.ne.s32.totalorder %s23, %s39
    %p41 = scmp.eq.s32.totalorder %s15, 0
    %p42 = por %p40, %p41
    %s44 = sadd.s32 %s43, 1
    %p47 = scmp.eq.s32.totalorder %s9, 1
    %p48 = scmp.ne.s32.totalorder %s43, %s45
    %p49 = scmp.eq.s32.totalorder %s9, 0
    %p50 = por %p48, %p49
    %p51 = scmp.ne.s32.totalorder %s43, %s45
    %p52 = scmp.eq.s32.totalorder %s14, 1
    %p53 = por %p51, %p52
    %p54 = scmp.ne.s32.totalorder %s45, %s46
    %p55 = scmp.eq.s32.totalorder %s14, 0
    %p56 = por %p54, %p55
    %p57 = scmp.ne.s32.totalorder %s45, %s46
    %p58 = scmp.eq.s32.totalorder %s15, 1
    %p59 = por %p57, %p58
    %p61 = scmp.ne.s32.totalorder %s46, %s60
    %p62 = scmp.eq.s32.totalorder %s15, 0
    %p63 = por %p61, %p62
    %s65 = sadd.s32 %s64, 1
    %p68 = scmp.eq.s32.totalorder %s9, 1
    %p69 = scmp.ne.s32.totalorder %s64, %s66
    %p70 = scmp.eq.s32.totalorder %s9, 0
    %p71 = por %p69, %p70
    %p72 = scmp.ne.s32.totalorder %s64, %s66
    %p73 = scmp.eq.s32.totalorder %s14, 1
    %p74 = por %p72, %p73
    %p75 = scmp.ne.s32.totalorder %s66, %s67
    %p76 = scmp.eq.s32.totalorder %s14, 0
    %p77 = por %p75, %p76
    %p78 = scmp.ne.s32.totalorder %s66, %s67
    %p79 = scmp.eq.s32.totalorder %s15, 1
    %p80 = por %p78, %p79
    %p82 = scmp.ne.s32.totalorder %s67, %s81
    %p83 = scmp.eq.s32.totalorder %s15, 0
    %p84 = por %p82, %p83
    %s85 = ssub.s32 %s9, %s16
    %p86 = scmp.eq.s32.totalorder %s85, 0
    %s88 = sadd.s32 %s87, 1
    %s89 = scalar_select %p86, %s87, %s88
    %p92 = pneg %p86
    %p93 = scmp.eq.s32.totalorder %s9, 1
    %p94 = por %p92, %p93
    %p95 = scmp.ne.s32.totalorder %s87, %s90
    %p96 = scmp.eq.s32.totalorder %s9, 0
    %p97 = por %p95, %p96
    %p98 = scmp.ne.s32.totalorder %s87, %s90
    %p99 = scmp.eq.s32.totalorder %s14, 1
    %p100 = por %p98, %p99
    %p101 = scmp.ne.s32.totalorder %s90, %s91
    %p102 = scmp.eq.s32.totalorder %s14, 0
    %p103 = por %p101, %p102
    %p104 = scmp.ne.s32.totalorder %s90, %s91
    %p105 = scmp.eq.s32.totalorder %s15, 1
    %p106 = por %p104, %p105
    %p108 = scmp.ne.s32.totalorder %s91, %s107
    %p109 = scmp.eq.s32.totalorder %s15, 0
    %p110 = por %p108, %p109
    %p111 = scmp.le.s32.totalorder 1, %s9
    %p112 = scmp.lt.s32.totalorder %s9, 3
    %p113 = pnand %p111, %p112
    %p114 = pneg %p113
    // Predicated region
    $region9: #{basic_conv2d.3} parent=5 // pred_check
      _
    $region10: #{basic_conv2d.3} parent=5 // pred_check_branch
      %116 = sbr.rel (%p113) target = $region12
    $region11: #{basic_conv2d.3} parent=5 // pred_region
      %s117 = ssub.s32 %s9, 1
      // Predicated region
      $region13: #{basic_conv2d.3} parent=11 // pred_check
        %p118 = pneg %p56
      $region14: #{basic_conv2d.3} parent=11 // pred_check_branch
        %120 = sbr.rel (%p118) target = $region16
      $region15: #{basic_conv2d.3} parent=11 // pred_region
        _
      $region16: #{basic_conv2d.3} parent=11 // pred_fallthru
        _
      // Predicated region
      $region17: #{basic_conv2d.3} parent=11 // pred_check
        %p121 = pneg %p77
      $region18: #{basic_conv2d.3} parent=11 // pred_check_branch
        %123 = sbr.rel (%p121) target = $region20
      $region19: #{basic_conv2d.3} parent=11 // pred_region
        _
      $region20: #{basic_conv2d.3} parent=11 // pred_fallthru
        _
    $region12: #{basic_conv2d.3} parent=5 // pred_fallthru
      _
    %p124 = scmp.lt.s32.totalorder %s9, 2
    // Predicated region
    $region21: #{basic_conv2d.3} parent=5 // pred_check
      %p125 = pneg %p124
    $region22: #{basic_conv2d.3} parent=5 // pred_check_branch
      %127 = sbr.rel (%p125) target = $region24
    $region23: #{basic_conv2d.3} parent=5 // pred_region
      // Predicated region
      $region25: #{basic_conv2d.3} parent=23 // pred_check
        %p128 = pneg %p29
      $region26: #{basic_conv2d.3} parent=23 // pred_check_branch
        %130 = sbr.rel (%p128) target = $region28
      $region27: #{basic_conv2d.3} parent=23 // pred_region
        %s131 = smul.u32 32, %s9
        %p132 = scmp.lt.s32.totalorder %s131, 63
        %s133 = scalar_select %p132, %s131, 63
        %s134 = smul.addr %s133, 8
        %s135 = scalar_lea.vmem %s0, %s134
        %s136 = smul.u32 32, %s9
      $region28: #{basic_conv2d.3} parent=23 // pred_fallthru
        _
    $region24: #{basic_conv2d.3} parent=5 // pred_fallthru
      _
    %p137 = scmp.le.s32.totalorder 1, %s9
    %p138 = scmp.lt.s32.totalorder %s9, 3
    %p139 = pnand %p137, %p138
    %p140 = pneg %p139
    // Predicated region
    $region29: #{basic_conv2d.3} parent=5 // pred_check
      _
    $region30: #{basic_conv2d.3} parent=5 // pred_check_branch
      %142 = sbr.rel (%p139) target = $region32
    $region31: #{basic_conv2d.3} parent=5 // pred_region
      %s143 = ssub.s32 %s9, 1
      %s144 = smul.u32 32, %s14
      %p145 = scmp.lt.s32.totalorder %s144, 63
      %s146 = scalar_select %p145, %s144, 63
      %s147 = smul.addr %s146, 8
      %s148 = scalar_lea.vmem %s0, %s147
      %p149 = pneg %p35
      %p150 = pneg %p32
      %p151 = pneg %p56
      %p152 = pneg %p53
      %p153 = pneg %p77
      %p154 = pneg %p74
      %p155 = pneg %p103
      %p156 = pneg %p100
      %s157 = smul.u32 32, %s14
      %p158 = scmp.lt.s32.totalorder %s157, 63
      %s159 = scalar_select %p158, %s157, 63
      %s160 = smul.addr %s159, 8
      %s161 = scalar_lea.vmem %s3, %s160
      %s162 = smul.u32 32, %s14
      %p163 = scmp.lt.s32.totalorder %s162, 63
      %s164 = scalar_select %p163, %s162, 63
      %s165 = smul.addr %s164, 8
      %s166 = scalar_lea.vmem %s0, %s165
      %s167 = smul.u32 32, %s14
      %s168 = smul.u32 32, %s14
      %p169 = scmp.lt.s32.totalorder %s168, 63
      %s170 = scalar_select %p169, %s168, 63
      %s171 = smul.addr %s170, 8
      %s172 = scalar_lea.vmem %s3, %s171
      %s173 = smul.u32 32, %s14
      %v174 = vld [vmem:[%s166] sm:$0xff]
      %v175 = vld [vmem:[%s166 + $0x8] sm:$0xff]
      %v176 = vld [vmem:[%s166 + $0x10] sm:$0xff]
      %v177 = vld [vmem:[%s166 + $0x18] sm:$0xff]
      %v178 = vld [vmem:[%s166 + $0x20] sm:$0xff]
      %v179 = vld [vmem:[%s166 + $0x28] sm:$0xff]
      %v180 = vld [vmem:[%s166 + $0x30] sm:$0xff]
      %v181 = vld [vmem:[%s166 + $0x38] sm:$0xff]
      %v182 = vld [vmem:[%s166 + $0x40] sm:$0xff]
      %v183 = vld [vmem:[%s166 + $0x48] sm:$0xff]
      %v184 = vld [vmem:[%s166 + $0x50] sm:$0xff]
      %v185 = vld [vmem:[%s166 + $0x58] sm:$0xff]
      %v186 = vld [vmem:[%s166 + $0x60] sm:$0xff]
      %v187 = vld [vmem:[%s166 + $0x68] sm:$0xff]
      %v188 = vld [vmem:[%s166 + $0x70] sm:$0xff]
      %v189 = vld [vmem:[%s166 + $0x78] sm:$0xff]
      %v190 = vld [vmem:[%s166 + $0x80] sm:$0xff]
      %v191 = vld [vmem:[%s166 + $0x88] sm:$0xff]
      %v192 = vld [vmem:[%s166 + $0x90] sm:$0xff]
      %v193 = vld [vmem:[%s166 + $0x98] sm:$0xff]
      %v194 = vld [vmem:[%s166 + $0xa0] sm:$0xff]
      %v195 = vld [vmem:[%s166 + $0xa8] sm:$0xff]
      %v196 = vld [vmem:[%s166 + $0xb0] sm:$0xff]
      %v197 = vld [vmem:[%s166 + $0xb8] sm:$0xff]
      %v198 = vld [vmem:[%s166 + $0xc0] sm:$0xff]
      %v199 = vld [vmem:[%s166 + $0xc8] sm:$0xff]
      %v200 = vld [vmem:[%s166 + $0xd0] sm:$0xff]
      %v201 = vld [vmem:[%s166 + $0xd8] sm:$0xff]
      %v202 = vld [vmem:[%s166 + $0xe0] sm:$0xff]
      %v203 = vld [vmem:[%s166 + $0xe8] sm:$0xff]
      %v204 = vld [vmem:[%s166 + $0xf0] sm:$0xff]
      %v205 = vld [vmem:[%s166 + $0xf8] sm:$0xff]
      %v206 = vld [vmem:[%s1] sm:$0x1]
      %v208 = vlaneseq
      %v209 = vshrl.u32 %v208, 7
      %v210 = vsub.s32 0, %v209
      %v211 = vrot.slane %v206, %v210
      %v213 = vmul.f32 %v174, %v211
      %v214 = vmul.f32 %v175, %v211
      %v215 = vmul.f32 %v176, %v211
      %v216 = vmul.f32 %v177, %v211
      %v217 = vmul.f32 %v178, %v211
      %v218 = vmul.f32 %v179, %v211
      %v219 = vmul.f32 %v180, %v211
      %v220 = vmul.f32 %v181, %v211
      %v221 = vmul.f32 %v182, %v211
      %v222 = vmul.f32 %v183, %v211
      %v223 = vmul.f32 %v184, %v211
      %v224 = vmul.f32 %v185, %v211
      %v225 = vmul.f32 %v186, %v211
      %v226 = vmul.f32 %v187, %v211
      %v227 = vmul.f32 %v188, %v211
      %v228 = vmul.f32 %v189, %v211
      %v229 = vmul.f32 %v190, %v211
      %v230 = vmul.f32 %v191, %v211
      %v231 = vmul.f32 %v192, %v211
      %v232 = vmul.f32 %v193, %v211
      %v233 = vmul.f32 %v194, %v211
      %v234 = vmul.f32 %v195, %v211
      %v235 = vmul.f32 %v196, %v211
      %v236 = vmul.f32 %v197, %v211
      %v237 = vmul.f32 %v198, %v211
      %v238 = vmul.f32 %v199, %v211
      %v239 = vmul.f32 %v200, %v211
      %v240 = vmul.f32 %v201, %v211
      %v241 = vmul.f32 %v202, %v211
      %v242 = vmul.f32 %v203, %v211
      %v243 = vmul.f32 %v204, %v211
      %v244 = vmul.f32 %v205, %v211
      %v245 = vld [vmem:[%s2] sm:$0x1]
      %v247 = vlaneseq
      %v248 = vshrl.u32 %v247, 7
      %v249 = vsub.s32 0, %v248
      %v250 = vrot.slane %v245, %v249
      %v252 = vadd.f32 %v213, %v250
      %v253 = vadd.f32 %v214, %v250
      %v254 = vadd.f32 %v215, %v250
      %v255 = vadd.f32 %v216, %v250
      %v256 = vadd.f32 %v217, %v250
      %v257 = vadd.f32 %v218, %v250
      %v258 = vadd.f32 %v219, %v250
      %v259 = vadd.f32 %v220, %v250
      %v260 = vadd.f32 %v221, %v250
      %v261 = vadd.f32 %v222, %v250
      %v262 = vadd.f32 %v223, %v250
      %v263 = vadd.f32 %v224, %v250
      %v264 = vadd.f32 %v225, %v250
      %v265 = vadd.f32 %v226, %v250
      %v266 = vadd.f32 %v227, %v250
      %v267 = vadd.f32 %v228, %v250
      %v268 = vadd.f32 %v229, %v250
      %v269 = vadd.f32 %v230, %v250
      %v270 = vadd.f32 %v231, %v250
      %v271 = vadd.f32 %v232, %v250
      %v272 = vadd.f32 %v233, %v250
      %v273 = vadd.f32 %v234, %v250
      %v274 = vadd.f32 %v235, %v250
      %v275 = vadd.f32 %v236, %v250
      %v276 = vadd.f32 %v237, %v250
      %v277 = vadd.f32 %v238, %v250
      %v278 = vadd.f32 %v239, %v250
      %v279 = vadd.f32 %v240, %v250
      %v280 = vadd.f32 %v241, %v250
      %v281 = vadd.f32 %v242, %v250
      %v282 = vadd.f32 %v243, %v250
      %v283 = vadd.f32 %v244, %v250
      %v284 = vmax.f32 %v252, 0.0
      %v285 = vmax.f32 %v253, 0.0
      %v286 = vmax.f32 %v254, 0.0
      %v287 = vmax.f32 %v255, 0.0
      %v288 = vmax.f32 %v256, 0.0
      %v289 = vmax.f32 %v257, 0.0
      %v290 = vmax.f32 %v258, 0.0
      %v291 = vmax.f32 %v259, 0.0
      %v292 = vmax.f32 %v260, 0.0
      %v293 = vmax.f32 %v261, 0.0
      %v294 = vmax.f32 %v262, 0.0
      %v295 = vmax.f32 %v263, 0.0
      %v296 = vmax.f32 %v264, 0.0
      %v297 = vmax.f32 %v265, 0.0
      %v298 = vmax.f32 %v266, 0.0
      %v299 = vmax.f32 %v267, 0.0
      %v300 = vmax.f32 %v268, 0.0
      %v301 = vmax.f32 %v269, 0.0
      %v302 = vmax.f32 %v270, 0.0
      %v303 = vmax.f32 %v271, 0.0
      %v304 = vmax.f32 %v272, 0.0
      %v305 = vmax.f32 %v273, 0.0
      %v306 = vmax.f32 %v274, 0.0
      %v307 = vmax.f32 %v275, 0.0
      %v308 = vmax.f32 %v276, 0.0
      %v309 = vmax.f32 %v277, 0.0
      %v310 = vmax.f32 %v278, 0.0
      %v311 = vmax.f32 %v279, 0.0
      %v312 = vmax.f32 %v280, 0.0
      %v313 = vmax.f32 %v281, 0.0
      %v314 = vmax.f32 %v282, 0.0
      %v315 = vmax.f32 %v283, 0.0
      %316 = vst [vmem:[%s172] sm:$0xff] %v284
      %317 = vst [vmem:[%s172 + $0x8] sm:$0xff] %v285
      %318 = vst [vmem:[%s172 + $0x10] sm:$0xff] %v286
      %319 = vst [vmem:[%s172 + $0x18] sm:$0xff] %v287
      %320 = vst [vmem:[%s172 + $0x20] sm:$0xff] %v288
      %321 = vst [vmem:[%s172 + $0x28] sm:$0xff] %v289
      %322 = vst [vmem:[%s172 + $0x30] sm:$0xff] %v290
      %323 = vst [vmem:[%s172 + $0x38] sm:$0xff] %v291
      %324 = vst [vmem:[%s172 + $0x40] sm:$0xff] %v292
      %325 = vst [vmem:[%s172 + $0x48] sm:$0xff] %v293
      %326 = vst [vmem:[%s172 + $0x50] sm:$0xff] %v294
      %327 = vst [vmem:[%s172 + $0x58] sm:$0xff] %v295
      %328 = vst [vmem:[%s172 + $0x60] sm:$0xff] %v296
      %329 = vst [vmem:[%s172 + $0x68] sm:$0xff] %v297
      %330 = vst [vmem:[%s172 + $0x70] sm:$0xff] %v298
      %331 = vst [vmem:[%s172 + $0x78] sm:$0xff] %v299
      %332 = vst [vmem:[%s172 + $0x80] sm:$0xff] %v300
      %333 = vst [vmem:[%s172 + $0x88] sm:$0xff] %v301
      %334 = vst [vmem:[%s172 + $0x90] sm:$0xff] %v302
      %335 = vst [vmem:[%s172 + $0x98] sm:$0xff] %v303
      %336 = vst [vmem:[%s172 + $0xa0] sm:$0xff] %v304
      %337 = vst [vmem:[%s172 + $0xa8] sm:$0xff] %v305
      %338 = vst [vmem:[%s172 + $0xb0] sm:$0xff] %v306
      %339 = vst [vmem:[%s172 + $0xb8] sm:$0xff] %v307
      %340 = vst [vmem:[%s172 + $0xc0] sm:$0xff] %v308
      %341 = vst [vmem:[%s172 + $0xc8] sm:$0xff] %v309
      %342 = vst [vmem:[%s172 + $0xd0] sm:$0xff] %v310
      %343 = vst [vmem:[%s172 + $0xd8] sm:$0xff] %v311
      %344 = vst [vmem:[%s172 + $0xe0] sm:$0xff] %v312
      %345 = vst [vmem:[%s172 + $0xe8] sm:$0xff] %v313
      %346 = vst [vmem:[%s172 + $0xf0] sm:$0xff] %v314
      %347 = vst [vmem:[%s172 + $0xf8] sm:$0xff] %v315
      %s348 = smul.u32 32, %s14
      %p349 = scmp.lt.s32.totalorder %s348, 63
      %s350 = scalar_select %p349, %s348, 63
      %s351 = smul.addr %s350, 8
      %s352 = scalar_lea.vmem %s3, %s351
      // Predicated region
      $region33: #{basic_conv2d.3} parent=31 // pred_check
        %p353 = pneg %p100
      $region34: #{basic_conv2d.3} parent=31 // pred_check_branch
        %355 = sbr.rel (%p353) target = $region36
      $region35: #{basic_conv2d.3} parent=31 // pred_region
        %s356 = smul.u32 32, %s14
      $region36: #{basic_conv2d.3} parent=31 // pred_fallthru
        _
    $region32: #{basic_conv2d.3} parent=5 // pred_fallthru
      _
    %p357 = scmp.le.s32.totalorder 2, %s9
    // Predicated region
    $region37: #{basic_conv2d.3} parent=5 // pred_check
      %p358 = pneg %p357
    $region38: #{basic_conv2d.3} parent=5 // pred_check_branch
      %360 = sbr.rel (%p358) target = $region40
    $region39: #{basic_conv2d.3} parent=5 // pred_region
      %s361 = ssub.s32 %s9, 2
      // Predicated region
      $region41: #{basic_conv2d.3} parent=39 // pred_check
        %p362 = pneg %p106
      $region42: #{basic_conv2d.3} parent=39 // pred_check_branch
        %364 = sbr.rel (%p362) target = $region44
      $region43: #{basic_conv2d.3} parent=39 // pred_region
        %s365 = smul.u32 32, %s15
        %p366 = scmp.lt.s32.totalorder %s365, 63
        %s367 = scalar_select %p366, %s365, 63
        %s368 = smul.addr %s367, 8
        %s369 = scalar_lea.vmem %s3, %s368
      $region44: #{basic_conv2d.3} parent=39 // pred_fallthru
        _
    $region40: #{basic_conv2d.3} parent=5 // pred_fallthru
      _
  $region6: #{basic_conv2d.3} parent=0 // loop_footer
    %s13 = sadd.s32 1, %s9
  $region7: #{basic_conv2d.3} parent=0 // loop_footer_branch
    %8 = sbr.rel target = $region3
  $region8: #{basic_conv2d.3} parent=0 // loop_exit
    _

// kernel: basic_conv2d.2
$region0: #{basic_conv2d.2}
  #allocation0 [shape = 'u32[]', space=smem, size = 0x4, offset = 0x4, fixed_abs, tag = 'smem constant byte address 0x4 - core index']
  #allocation1 [shape = 'u32[144,128]{1,0:T(1,128)}', space=vmem, size = 0x12000, scoped, tag = 'internal scratch']
  %s0 = inlined_call_operand.vmem [shape: bf16[512,128], index: 0, kind: input, shape index: {}]
  %s1 = inlined_call_operand.vmem [shape: bf16[128,128], index: 1, kind: input, shape index: {}]
  %s2 = inlined_call_operand.vmem [shape: f32[512,128], index: 2, kind: output, shape index: {0}]
  %s3 = inlined_call_operand.vmem [shape: f32[16,128], index: 3, kind: output, shape index: {1}]
  %4 = xla_tuple %s2, %s3
  %s5 = sld [smem:[#allocation0]]
  $region49: #{basic_conv2d.2} parent=0
    _
  %s7 = ssub.s32 1, %s5
  %s8 = scalar_select 0, %s7, %s5
  loop: start=0, step=1, limit=4
  $region2: #{basic_conv2d.2} parent=0 // loop_pre_header
    _
  $region3: #{basic_conv2d.2} parent=0 // loop_header
    %s10 = sphi 0, %s14
    %p11 = scmp.ge.s32.totalorder %s10, 4
    %s20 = sphi 0, %s22
    %s23 = sphi 0, %s20
    %s24 = sphi 0, %s23
    %s40 = sphi 0, %s24
    %s44 = sphi 0, %s44
    %s46 = sphi 0, %s44
    %s47 = sphi 0, %s46
    %s61 = sphi 0, %s47
    %s67 = sphi 0, %s69
    %s70 = sphi 0, %s67
    %s71 = sphi 0, %s70
    %s87 = sphi 0, %s71
    %s93 = sphi 0, %s95
    %s96 = sphi 0, %s93
    %s97 = sphi 0, %s96
    %s113 = sphi 0, %s97
  $region4: #{basic_conv2d.2} parent=0 // loop_header_branch
    %13 = sbr.rel (%p11) target = $region8
  $region5: #{basic_conv2d.2} parent=0 // loop_body
    %s15 = ssub.s32 %s10, 1
    %s16 = ssub.s32 %s10, 2
    %s17 = sadd.s32 %s10, 1
    %s18 = ssub.s32 %s10, %s17
    %p19 = scmp.eq.s32.totalorder %s18, 0
    %s21 = sadd.s32 %s20, 1
    %s22 = scalar_select %p19, %s20, %s21
    %p25 = pneg %p19
    %p26 = scmp.eq.s32.totalorder %s10, 1
    %p27 = por %p25, %p26
    %p28 = scmp.ne.s32.totalorder %s20, %s23
    %p29 = scmp.eq.s32.totalorder %s10, 0
    %p30 = por %p28, %p29
    %p31 = scmp.ne.s32.totalorder %s20, %s23
    %p32 = scmp.eq.s32.totalorder %s15, 1
    %p33 = por %p31, %p32
    %p34 = scmp.ne.s32.totalorder %s23, %s24
    %p35 = scmp.eq.s32.totalorder %s15, 0
    %p36 = por %p34, %p35
    %p37 = scmp.ne.s32.totalorder %s23, %s24
    %p38 = scmp.eq.s32.totalorder %s16, 1
    %p39 = por %p37, %p38
    %p41 = scmp.ne.s32.totalorder %s24, %s40
    %p42 = scmp.eq.s32.totalorder %s16, 0
    %p43 = por %p41, %p42
    %s45 = sadd.s32 %s44, 1
    %p48 = scmp.eq.s32.totalorder %s10, 1
    %p49 = scmp.ne.s32.totalorder %s44, %s46
    %p50 = scmp.eq.s32.totalorder %s10, 0
    %p51 = por %p49, %p50
    %p52 = scmp.ne.s32.totalorder %s44, %s46
    %p53 = scmp.eq.s32.totalorder %s15, 1
    %p54 = por %p52, %p53
    %p55 = scmp.ne.s32.totalorder %s46, %s47
    %p56 = scmp.eq.s32.totalorder %s15, 0
    %p57 = por %p55, %p56
    %p58 = scmp.ne.s32.totalorder %s46, %s47
    %p59 = scmp.eq.s32.totalorder %s16, 1
    %p60 = por %p58, %p59
    %p62 = scmp.ne.s32.totalorder %s47, %s61
    %p63 = scmp.eq.s32.totalorder %s16, 0
    %p64 = por %p62, %p63
    %s65 = ssub.s32 %s10, %s17
    %p66 = scmp.eq.s32.totalorder %s65, 0
    %s68 = sadd.s32 %s67, 1
    %s69 = scalar_select %p66, %s67, %s68
    %p72 = pneg %p66
    %p73 = scmp.eq.s32.totalorder %s10, 1
    %p74 = por %p72, %p73
    %p75 = scmp.ne.s32.totalorder %s67, %s70
    %p76 = scmp.eq.s32.totalorder %s10, 0
    %p77 = por %p75, %p76
    %p78 = scmp.ne.s32.totalorder %s67, %s70
    %p79 = scmp.eq.s32.totalorder %s15, 1
    %p80 = por %p78, %p79
    %p81 = scmp.ne.s32.totalorder %s70, %s71
    %p82 = scmp.eq.s32.totalorder %s15, 0
    %p83 = por %p81, %p82
    %p84 = scmp.ne.s32.totalorder %s70, %s71
    %p85 = scmp.eq.s32.totalorder %s16, 1
    %p86 = por %p84, %p85
    %p88 = scmp.ne.s32.totalorder %s71, %s87
    %p89 = scmp.eq.s32.totalorder %s16, 0
    %p90 = por %p88, %p89
    %s91 = ssub.s32 %s10, %s17
    %p92 = scmp.eq.s32.totalorder %s91, 0
    %s94 = sadd.s32 %s93, 1
    %s95 = scalar_select %p92, %s93, %s94
    %p98 = pneg %p92
    %p99 = scmp.eq.s32.totalorder %s10, 1
    %p100 = por %p98, %p99
    %p101 = scmp.ne.s32.totalorder %s93, %s96
    %p102 = scmp.eq.s32.totalorder %s10, 0
    %p103 = por %p101, %p102
    %p104 = scmp.ne.s32.totalorder %s93, %s96
    %p105 = scmp.eq.s32.totalorder %s15, 1
    %p106 = por %p104, %p105
    %p107 = scmp.ne.s32.totalorder %s96, %s97
    %p108 = scmp.eq.s32.totalorder %s15, 0
    %p109 = por %p107, %p108
    %p110 = scmp.ne.s32.totalorder %s96, %s97
    %p111 = scmp.eq.s32.totalorder %s16, 1
    %p112 = por %p110, %p111
    %p114 = scmp.ne.s32.totalorder %s97, %s113
    %p115 = scmp.eq.s32.totalorder %s16, 0
    %p116 = por %p114, %p115
    %p117 = scmp.le.s32.totalorder 1, %s10
    %p118 = scmp.lt.s32.totalorder %s10, 3
    %p119 = pnand %p117, %p118
    %p120 = pneg %p119
    // Predicated region
    $region9: #{basic_conv2d.2} parent=5 // pred_check
      _
    $region10: #{basic_conv2d.2} parent=5 // pred_check_branch
      %122 = sbr.rel (%p119) target = $region12
    $region11: #{basic_conv2d.2} parent=5 // pred_region
      %s123 = ssub.s32 %s10, 1
      // Predicated region
      $region13: #{basic_conv2d.2} parent=11 // pred_check
        %p124 = pneg %p57
      $region14: #{basic_conv2d.2} parent=11 // pred_check_branch
        %126 = sbr.rel (%p124) target = $region16
      $region15: #{basic_conv2d.2} parent=11 // pred_region
        _
      $region16: #{basic_conv2d.2} parent=11 // pred_fallthru
        _
    $region12: #{basic_conv2d.2} parent=5 // pred_fallthru
      _
    %p127 = scmp.lt.s32.totalorder %s10, 2
    // Predicated region
    $region17: #{basic_conv2d.2} parent=5 // pred_check
      %p128 = pneg %p127
    $region18: #{basic_conv2d.2} parent=5 // pred_check_branch
      %130 = sbr.rel (%p128) target = $region20
    $region19: #{basic_conv2d.2} parent=5 // pred_region
      // Predicated region
      $region21: #{basic_conv2d.2} parent=19 // pred_check
        %p131 = pneg %p30
      $region22: #{basic_conv2d.2} parent=19 // pred_check_branch
        %133 = sbr.rel (%p131) target = $region24
      $region23: #{basic_conv2d.2} parent=19 // pred_region
        %s134 = smul.u32 32, %s10
        %p135 = scmp.lt.s32.totalorder %s134, 63
        %s136 = scalar_select %p135, %s134, 63
        %s137 = smul.addr %s136, 4
        %s138 = scalar_lea.vmem %s0, %s137
        %s139 = smul.u32 32, %s10
      $region24: #{basic_conv2d.2} parent=19 // pred_fallthru
        _
    $region20: #{basic_conv2d.2} parent=5 // pred_fallthru
      _
    %p140 = scmp.le.s32.totalorder 1, %s10
    %p141 = scmp.lt.s32.totalorder %s10, 3
    %p142 = pnand %p140, %p141
    %p143 = pneg %p142
    // Predicated region
    $region25: #{basic_conv2d.2} parent=5 // pred_check
      _
    $region26: #{basic_conv2d.2} parent=5 // pred_check_branch
      %145 = sbr.rel (%p142) target = $region28
    $region27: #{basic_conv2d.2} parent=5 // pred_region
      %s146 = ssub.s32 %s10, 1
      %s147 = smul.u32 32, %s15
      %p148 = scmp.lt.s32.totalorder %s147, 63
      %s149 = scalar_select %p148, %s147, 63
      %s150 = smul.addr %s149, 4
      %s151 = scalar_lea.vmem %s0, %s150
      %p152 = pneg %p36
      %p153 = pneg %p33
      %p154 = pneg %p57
      %p155 = pneg %p54
      %p156 = pneg %p83
      %p157 = pneg %p80
      %s158 = smul.u32 32, %s15
      %p159 = scmp.lt.s32.totalorder %s158, 63
      %s160 = scalar_select %p159, %s158, 63
      %s161 = smul.addr %s160, 8
      %s162 = scalar_lea.vmem %s2, %s161
      %p163 = pneg %p109
      %p164 = pneg %p106
      %p165 = scmp.lt.s32.totalorder %s15, 1
      %s166 = scalar_select %p165, %s15, 1
      %s167 = smul.addr %s166, 8
      %s168 = scalar_lea.vmem %s3, %s167
      %s169 = smul.u32 32, %s15
      %p170 = scmp.lt.s32.totalorder %s169, 63
      %s171 = scalar_select %p170, %s169, 63
      %s172 = smul.addr %s171, 4
      %s173 = scalar_lea.vmem %s0, %s172
      %s174 = smul.u32 32, %s15
      %s175 = smul.u32 32, %s15
      %p176 = scmp.lt.s32.totalorder %s175, 63
      %s177 = scalar_select %p176, %s175, 63
      %s178 = smul.addr %s177, 8
      %s179 = scalar_lea.vmem %s2, %s178
      %s180 = smul.u32 32, %s15
      %p181 = scmp.lt.s32.totalorder %s15, 1
      %s182 = scalar_select %p181, %s15, 1
      %s183 = smul.addr %s182, 8
      %s184 = scalar_lea.vmem %s3, %s183
      %v186 = vld [vmem:[%s173] sm:$0xf]
      %v187 = vld [vmem:[%s173 + $0x4] sm:$0xf]
      %v188 = vld [vmem:[%s173 + $0x8] sm:$0xf]
      %v189 = vld [vmem:[%s173 + $0xc] sm:$0xf]
      %v190 = vld [vmem:[%s173 + $0x10] sm:$0xf]
      %v191 = vld [vmem:[%s173 + $0x14] sm:$0xf]
      %v192 = vld [vmem:[%s173 + $0x18] sm:$0xf]
      %v193 = vld [vmem:[%s173 + $0x1c] sm:$0xf]
      %v194 = vld [vmem:[%s173 + $0x20] sm:$0xf]
      %v195 = vld [vmem:[%s173 + $0x24] sm:$0xf]
      %v196 = vld [vmem:[%s173 + $0x28] sm:$0xf]
      %v197 = vld [vmem:[%s173 + $0x2c] sm:$0xf]
      %v198 = vld [vmem:[%s173 + $0x30] sm:$0xf]
      %v199 = vld [vmem:[%s173 + $0x34] sm:$0xf]
      %v200 = vld [vmem:[%s173 + $0x38] sm:$0xf]
      %v201 = vld [vmem:[%s173 + $0x3c] sm:$0xf]
      %v202 = vld [vmem:[%s173 + $0x40] sm:$0xf]
      %v203 = vld [vmem:[%s173 + $0x44] sm:$0xf]
      %v204 = vld [vmem:[%s173 + $0x48] sm:$0xf]
      %v205 = vld [vmem:[%s173 + $0x4c] sm:$0xf]
      %v206 = vld [vmem:[%s173 + $0x50] sm:$0xf]
      %v207 = vld [vmem:[%s173 + $0x54] sm:$0xf]
      %v208 = vld [vmem:[%s173 + $0x58] sm:$0xf]
      %v209 = vld [vmem:[%s173 + $0x5c] sm:$0xf]
      %v210 = vld [vmem:[%s173 + $0x60] sm:$0xf]
      %v211 = vld [vmem:[%s173 + $0x64] sm:$0xf]
      %v212 = vld [vmem:[%s173 + $0x68] sm:$0xf]
      %v213 = vld [vmem:[%s173 + $0x6c] sm:$0xf]
      %v214 = vld [vmem:[%s173 + $0x70] sm:$0xf]
      %v215 = vld [vmem:[%s173 + $0x74] sm:$0xf]
      %v216 = vld [vmem:[%s173 + $0x78] sm:$0xf]
      %v217 = vld [vmem:[%s173 + $0x7c] sm:$0xf]
      %v218 = vld [vmem:[%s1] sm:$0xf]
      %v219 = vld [vmem:[%s1 + $0x4] sm:$0xf]
      %v220 = vld [vmem:[%s1 + $0x8] sm:$0xf]
      %v221 = vld [vmem:[%s1 + $0xc] sm:$0xf]
      %v222 = vld [vmem:[%s1 + $0x10] sm:$0xf]
      %v223 = vld [vmem:[%s1 + $0x14] sm:$0xf]
      %v224 = vld [vmem:[%s1 + $0x18] sm:$0xf]
      %v225 = vld [vmem:[%s1 + $0x1c] sm:$0xf]
      %v226 = vld [vmem:[%s1 + $0x20] sm:$0xf]
      %v227 = vld [vmem:[%s1 + $0x24] sm:$0xf]
      %v228 = vld [vmem:[%s1 + $0x28] sm:$0xf]
      %v229 = vld [vmem:[%s1 + $0x2c] sm:$0xf]
      %v230 = vld [vmem:[%s1 + $0x30] sm:$0xf]
      %v231 = vld [vmem:[%s1 + $0x34] sm:$0xf]
      %v232 = vld [vmem:[%s1 + $0x38] sm:$0xf]
      %v233 = vld [vmem:[%s1 + $0x3c] sm:$0xf]
      %v266 = vunpack.c.l.b16 %v186
      %v267 = vunpack.c.l.b16 %v187
      %v268 = vunpack.c.l.b16 %v188
      %v269 = vunpack.c.l.b16 %v189
      %v270 = vunpack.c.l.b16 %v190
      %v271 = vunpack.c.l.b16 %v191
      %v272 = vunpack.c.l.b16 %v192
      %v273 = vunpack.c.l.b16 %v193
      %v274 = vunpack.c.l.b16 %v194
      %v275 = vunpack.c.l.b16 %v195
      %v276 = vunpack.c.l.b16 %v196
      %v277 = vunpack.c.l.b16 %v197
      %v278 = vunpack.c.l.b16 %v198
      %v279 = vunpack.c.l.b16 %v199
      %v280 = vunpack.c.l.b16 %v200
      %v281 = vunpack.c.l.b16 %v201
      %v282 = vunpack.c.l.b16 %v202
      %v283 = vunpack.c.l.b16 %v203
      %v284 = vunpack.c.l.b16 %v204
      %v285 = vunpack.c.l.b16 %v205
      %v286 = vunpack.c.l.b16 %v206
      %v287 = vunpack.c.l.b16 %v207
      %v288 = vunpack.c.l.b16 %v208
      %v289 = vunpack.c.l.b16 %v209
      %v290 = vunpack.c.l.b16 %v210
      %v291 = vunpack.c.l.b16 %v211
      %v292 = vunpack.c.l.b16 %v212
      %v293 = vunpack.c.l.b16 %v213
      %v294 = vunpack.c.l.b16 %v214
      %v295 = vunpack.c.l.b16 %v215
      %v296 = vunpack.c.l.b16 %v216
      %v297 = vunpack.c.l.b16 %v217
      %v298 = vpack.c.b16 %v267, %v266
      %v299 = vpack.c.b16 %v269, %v268
      %v300 = vpack.c.b16 %v271, %v270
      %v301 = vpack.c.b16 %v273, %v272
      %v302 = vpack.c.b16 %v275, %v274
      %v303 = vpack.c.b16 %v277, %v276
      %v304 = vpack.c.b16 %v279, %v278
      %v305 = vpack.c.b16 %v281, %v280
      %v306 = vpack.c.b16 %v283, %v282
      %v307 = vpack.c.b16 %v285, %v284
      %v308 = vpack.c.b16 %v287, %v286
      %v309 = vpack.c.b16 %v289, %v288
      %v310 = vpack.c.b16 %v291, %v290
      %v311 = vpack.c.b16 %v293, %v292
      %v312 = vpack.c.b16 %v295, %v294
      %v313 = vpack.c.b16 %v297, %v296
      %v346 = vunpack.c.l.b16 %v218
      %v347 = vunpack.c.l.b16 %v219
      %v348 = vunpack.c.l.b16 %v220
      %v349 = vunpack.c.l.b16 %v221
      %v350 = vunpack.c.l.b16 %v222
      %v351 = vunpack.c.l.b16 %v223
      %v352 = vunpack.c.l.b16 %v224
      %v353 = vunpack.c.l.b16 %v225
      %v354 = vunpack.c.l.b16 %v226
      %v355 = vunpack.c.l.b16 %v227
      %v356 = vunpack.c.l.b16 %v228
      %v357 = vunpack.c.l.b16 %v229
      %v358 = vunpack.c.l.b16 %v230
      %v359 = vunpack.c.l.b16 %v231
      %v360 = vunpack.c.l.b16 %v232
      %v361 = vunpack.c.l.b16 %v233
      %v362 = vpack.c.b16 %v347, %v346
      %v363 = vpack.c.b16 %v349, %v348
      %v364 = vpack.c.b16 %v351, %v350
      %v365 = vpack.c.b16 %v353, %v352
      %v366 = vpack.c.b16 %v355, %v354
      %v367 = vpack.c.b16 %v357, %v356
      %v368 = vpack.c.b16 %v359, %v358
      %v369 = vpack.c.b16 %v361, %v360
      %378 = vmatprep.subr.bf16.mxu0 0
      %379 = vmatpush1.bf16.msra.mxu0 %v362
      %380 = vmatprep.subr.bf16.mxu0 0
      %381 = vmatpush1.bf16.msra.mxu0 %v363
      %382 = vmatprep.subr.bf16.mxu0 0
      %383 = vmatpush1.bf16.msra.mxu0 %v364
      %384 = vmatprep.subr.bf16.mxu0 0
      %385 = vmatpush1.bf16.msra.mxu0 %v365
      %386 = vmatprep.subr.bf16.mxu0 0
      %387 = vmatpush1.bf16.msra.mxu0 %v366
      %388 = vmatprep.subr.bf16.mxu0 0
      %389 = vmatpush1.bf16.msra.mxu0 %v367
      %390 = vmatprep.subr.bf16.mxu0 0
      %391 = vmatpush1.bf16.msra.mxu0 %v368
      %392 = vmatprep.subr.bf16.mxu0 0
      %393 = vmatpush1.bf16.msra.mxu0 %v369
      %394 = vmatprep.subr.bf16.mxu0 0
      %395 = vmatpush1.bf16.msra.mxu0 0
      %396 = vmatprep.subr.bf16.mxu0 0
      %397 = vmatpush1.bf16.msra.mxu0 0
      %398 = vmatprep.subr.bf16.mxu0 0
      %399 = vmatpush1.bf16.msra.mxu0 0
      %400 = vmatprep.subr.bf16.mxu0 0
      %401 = vmatpush1.bf16.msra.mxu0 0
      %402 = vmatprep.subr.bf16.mxu0 0
      %403 = vmatpush1.bf16.msra.mxu0 0
      %404 = vmatprep.subr.bf16.mxu0 0
      %405 = vmatpush1.bf16.msra.mxu0 0
      %406 = vmatprep.subr.bf16.mxu0 0
      %407 = vmatpush1.bf16.msra.mxu0 0
      %408 = vmatprep.subr.bf16.mxu0 0
      %409 = vmatpush1.bf16.msra.mxu0 0
      %410 = vmatprep.mubr.bf16.mxu0 0
      %411 = vmatmul.mubr.bf16.gmra.mrb[0].mxu0 %v298
      %v412 = vpop.f32.mrb[0].mxu0
      %v413 = vadd.f32 0.0, %v412
      %v414 = vpop.f32.mrb[0].mxu0
      %v415 = vpop.f32.mrb[0].mxu0
      %v416 = vadd.f32 0.0, %v415
      %v417 = vpop.f32.mrb[0].mxu0
      %418 = vmatprep.mubr.bf16.mxu0 0
      %419 = vmatmul.mubr.bf16.gmra.mrb[0].mxu0 %v299
      %v420 = vpop.f32.mrb[0].mxu0
      %v421 = vadd.f32 0.0, %v420
      %v422 = vpop.f32.mrb[0].mxu0
      %v423 = vpop.f32.mrb[0].mxu0
      %v424 = vadd.f32 0.0, %v423
      %v425 = vpop.f32.mrb[0].mxu0
      %426 = vmatprep.mubr.bf16.mxu0 0
      %427 = vmatmul.mubr.bf16.gmra.mrb[0].mxu0 %v300
      %v428 = vpop.f32.mrb[0].mxu0
      %v429 = vadd.f32 0.0, %v428
      %v430 = vpop.f32.mrb[0].mxu0
      %v431 = vpop.f32.mrb[0].mxu0
      %v432 = vadd.f32 0.0, %v431
      %v433 = vpop.f32.mrb[0].mxu0
      %434 = vmatprep.mubr.bf16.mxu0 0
      %435 = vmatmul.mubr.bf16.gmra.mrb[0].mxu0 %v301
      %v436 = vpop.f32.mrb[0].mxu0
      %v437 = vadd.f32 0.0, %v436
      %v438 = vpop.f32.mrb[0].mxu0
      %v439 = vpop.f32.mrb[0].mxu0
      %v440 = vadd.f32 0.0, %v439
      %v441 = vpop.f32.mrb[0].mxu0
      %442 = vmatprep.mubr.bf16.mxu0 0
      %443 = vmatmul.mubr.bf16.gmra.mrb[0].mxu0 %v302
      %v444 = vpop.f32.mrb[0].mxu0
      %v445 = vadd.f32 0.0, %v444
      %v446 = vpop.f32.mrb[0].mxu0
      %v447 = vpop.f32.mrb[0].mxu0
      %v448 = vadd.f32 0.0, %v447
      %v449 = vpop.f32.mrb[0].mxu0
      %450 = vmatprep.mubr.bf16.mxu0 0
      %451 = vmatmul.mubr.bf16.gmra.mrb[0].mxu0 %v303
      %v452 = vpop.f32.mrb[0].mxu0
      %v453 = vadd.f32 0.0, %v452
      %v454 = vpop.f32.mrb[0].mxu0
      %v455 = vpop.f32.mrb[0].mxu0
      %v456 = vadd.f32 0.0, %v455
      %v457 = vpop.f32.mrb[0].mxu0
      %458 = vmatprep.mubr.bf16.mxu0 0
      %459 = vmatmul.mubr.bf16.gmra.mrb[0].mxu0 %v304
      %v460 = vpop.f32.mrb[0].mxu0
      %v461 = vadd.f32 0.0, %v460
      %v462 = vpop.f32.mrb[0].mxu0
      %v463 = vpop.f32.mrb[0].mxu0
      %v464 = vadd.f32 0.0, %v463
      %v465 = vpop.f32.mrb[0].mxu0
      %466 = vmatprep.mubr.bf16.mxu0 0
      %467 = vmatmul.mubr.bf16.gmra.mrb[0].mxu0 %v305
      %v468 = vpop.f32.mrb[0].mxu0
      %v469 = vadd.f32 0.0, %v468
      %v470 = vpop.f32.mrb[0].mxu0
      %v471 = vpop.f32.mrb[0].mxu0
      %v472 = vadd.f32 0.0, %v471
      %v473 = vpop.f32.mrb[0].mxu0
      %474 = vmatprep.mubr.bf16.mxu0 0
      %475 = vmatmul.mubr.bf16.gmra.mrb[0].mxu0 %v306
      %v476 = vpop.f32.mrb[0].mxu0
      %v477 = vadd.f32 0.0, %v476
      %v478 = vpop.f32.mrb[0].mxu0
      %v479 = vpop.f32.mrb[0].mxu0
      %v480 = vadd.f32 0.0, %v479
      %v481 = vpop.f32.mrb[0].mxu0
      %482 = vmatprep.mubr.bf16.mxu0 0
      %483 = vmatmul.mubr.bf16.gmra.mrb[0].mxu0 %v307
      %v484 = vpop.f32.mrb[0].mxu0
      %v485 = vadd.f32 0.0, %v484
      %v486 = vpop.f32.mrb[0].mxu0
      %v487 = vpop.f32.mrb[0].mxu0
      %v488 = vadd.f32 0.0, %v487
      %v489 = vpop.f32.mrb[0].mxu0
      %490 = vmatprep.mubr.bf16.mxu0 0
      %491 = vmatmul.mubr.bf16.gmra.mrb[0].mxu0 %v308
      %v492 = vpop.f32.mrb[0].mxu0
      %v493 = vadd.f32 0.0, %v492
      %v494 = vpop.f32.mrb[0].mxu0
      %v495 = vpop.f32.mrb[0].mxu0
      %v496 = vadd.f32 0.0, %v495
      %v497 = vpop.f32.mrb[0].mxu0
      %498 = vmatprep.mubr.bf16.mxu0 0
      %499 = vmatmul.mubr.bf16.gmra.mrb[0].mxu0 %v309
      %v500 = vpop.f32.mrb[0].mxu0
      %v501 = vadd.f32 0.0, %v500
      %v502 = vpop.f32.mrb[0].mxu0
      %v503 = vpop.f32.mrb[0].mxu0
      %v504 = vadd.f32 0.0, %v503
      %v505 = vpop.f32.mrb[0].mxu0
      %506 = vmatprep.mubr.bf16.mxu0 0
      %507 = vmatmul.mubr.bf16.gmra.mrb[0].mxu0 %v310
      %v508 = vpop.f32.mrb[0].mxu0
      %v509 = vadd.f32 0.0, %v508
      %v510 = vpop.f32.mrb[0].mxu0
      %v511 = vpop.f32.mrb[0].mxu0
      %v512 = vadd.f32 0.0, %v511
      %v513 = vpop.f32.mrb[0].mxu0
      %514 = vmatprep.mubr.bf16.mxu0 0
      %515 = vmatmul.mubr.bf16.gmra.mrb[0].mxu0 %v311
      %v516 = vpop.f32.mrb[0].mxu0
      %v517 = vadd.f32 0.0, %v516
      %v518 = vpop.f32.mrb[0].mxu0
      %v519 = vpop.f32.mrb[0].mxu0
      %v520 = vadd.f32 0.0, %v519
      %v521 = vpop.f32.mrb[0].mxu0
      %522 = vmatprep.mubr.bf16.mxu0 0
      %523 = vmatmul.mubr.bf16.gmra.mrb[0].mxu0 %v312
      %v524 = vpop.f32.mrb[0].mxu0
      %v525 = vadd.f32 0.0, %v524
      %v526 = vpop.f32.mrb[0].mxu0
      %v527 = vpop.f32.mrb[0].mxu0
      %v528 = vadd.f32 0.0, %v527
      %v529 = vpop.f32.mrb[0].mxu0
      %530 = vmatprep.mubr.bf16.mxu0 0
      %531 = vmatmul.mubr.bf16.gmra.mrb[0].mxu0 %v313
      %v532 = vpop.f32.mrb[0].mxu0
      %v533 = vadd.f32 0.0, %v532
      %v534 = vpop.f32.mrb[0].mxu0
      %v535 = vpop.f32.mrb[0].mxu0
      %v536 = vadd.f32 0.0, %v535
      %v537 = vpop.f32.mrb[0].mxu0
      %538 = vdwg.mxu0
      %539 = vst [vmem:[%s179] sm:$0xff] %v413
      %540 = vst [vmem:[%s179 + $0x8] sm:$0xff] %v416
      %541 = vst [vmem:[%s179 + $0x10] sm:$0xff] %v421
      %542 = vst [vmem:[%s179 + $0x18] sm:$0xff] %v424
      %543 = vst [vmem:[%s179 + $0x20] sm:$0xff] %v429
      %544 = vst [vmem:[%s179 + $0x28] sm:$0xff] %v432
      %545 = vst [vmem:[%s179 + $0x30] sm:$0xff] %v437
      %546 = vst [vmem:[%s179 + $0x38] sm:$0xff] %v440
      %547 = vst [vmem:[%s179 + $0x40] sm:$0xff] %v445
      %548 = vst [vmem:[%s179 + $0x48] sm:$0xff] %v448
      %549 = vst [vmem:[%s179 + $0x50] sm:$0xff] %v453
      %550 = vst [vmem:[%s179 + $0x58] sm:$0xff] %v456
      %551 = vst [vmem:[%s179 + $0x60] sm:$0xff] %v461
      %552 = vst [vmem:[%s179 + $0x68] sm:$0xff] %v464
      %553 = vst [vmem:[%s179 + $0x70] sm:$0xff] %v469
      %554 = vst [vmem:[%s179 + $0x78] sm:$0xff] %v472
      %555 = vst [vmem:[%s179 + $0x80] sm:$0xff] %v477
      %556 = vst [vmem:[%s179 + $0x88] sm:$0xff] %v480
      %557 = vst [vmem:[%s179 + $0x90] sm:$0xff] %v485
      %558 = vst [vmem:[%s179 + $0x98] sm:$0xff] %v488
      %559 = vst [vmem:[%s179 + $0xa0] sm:$0xff] %v493
      %560 = vst [vmem:[%s179 + $0xa8] sm:$0xff] %v496
      %561 = vst [vmem:[%s179 + $0xb0] sm:$0xff] %v501
      %562 = vst [vmem:[%s179 + $0xb8] sm:$0xff] %v504
      %563 = vst [vmem:[%s179 + $0xc0] sm:$0xff] %v509
      %564 = vst [vmem:[%s179 + $0xc8] sm:$0xff] %v512
      %565 = vst [vmem:[%s179 + $0xd0] sm:$0xff] %v517
      %566 = vst [vmem:[%s179 + $0xd8] sm:$0xff] %v520
      %567 = vst [vmem:[%s179 + $0xe0] sm:$0xff] %v525
      %568 = vst [vmem:[%s179 + $0xe8] sm:$0xff] %v528
      %569 = vst [vmem:[%s179 + $0xf0] sm:$0xff] %v533
      %570 = vst [vmem:[%s179 + $0xf8] sm:$0xff] %v536
      %v571 = vadd.f32 %v413, %v416
      %v572 = vadd.f32 %v571, %v421
      %v573 = vadd.f32 %v572, %v424
      %v574 = vadd.f32 %v573, %v429
      %v575 = vadd.f32 %v574, %v432
      %v576 = vadd.f32 %v575, %v437
      %v577 = vadd.f32 %v576, %v440
      %v578 = vadd.f32 %v577, %v445
      %v579 = vadd.f32 %v578, %v448
      %v580 = vadd.f32 %v579, %v453
      %v581 = vadd.f32 %v580, %v456
      %v582 = vadd.f32 %v581, %v461
      %v583 = vadd.f32 %v582, %v464
      %v584 = vadd.f32 %v583, %v469
      %v585 = vadd.f32 %v584, %v472
      %v586 = vadd.f32 %v585, %v477
      %v587 = vadd.f32 %v586, %v480
      %v588 = vadd.f32 %v587, %v485
      %v589 = vadd.f32 %v588, %v488
      %v590 = vadd.f32 %v589, %v493
      %v591 = vadd.f32 %v590, %v496
      %v592 = vadd.f32 %v591, %v501
      %v593 = vadd.f32 %v592, %v504
      %v594 = vadd.f32 %v593, %v509
      %v595 = vadd.f32 %v594, %v512
      %v596 = vadd.f32 %v595, %v517
      %v597 = vadd.f32 %v596, %v520
      %v598 = vadd.f32 %v597, %v525
      %v599 = vadd.f32 %v598, %v528
      %v600 = vadd.f32 %v599, %v533
      %v601 = vadd.f32 %v600, %v536
      %v602 = vrot.slane %v601, 4
      %v603 = vadd.f32 %v601, %v602
      %v604 = vrot.slane %v603, 2
      %v605 = vadd.f32 %v603, %v604
      %v606 = vrot.slane %v605, 1
      %v607 = vadd.f32 %v605, %v606
      %v608 = vmul.f32 %v413, %v413
      %v609 = vmul.f32 %v416, %v416
      %v610 = vmul.f32 %v421, %v421
      %v611 = vmul.f32 %v424, %v424
      %v612 = vmul.f32 %v429, %v429
      %v613 = vmul.f32 %v432, %v432
      %v614 = vmul.f32 %v437, %v437
      %v615 = vmul.f32 %v440, %v440
      %v616 = vmul.f32 %v445, %v445
      %v617 = vmul.f32 %v448, %v448
      %v618 = vmul.f32 %v453, %v453
      %v619 = vmul.f32 %v456, %v456
      %v620 = vmul.f32 %v461, %v461
      %v621 = vmul.f32 %v464, %v464
      %v622 = vmul.f32 %v469, %v469
      %v623 = vmul.f32 %v472, %v472
      %v624 = vmul.f32 %v477, %v477
      %v625 = vmul.f32 %v480, %v480
      %v626 = vmul.f32 %v485, %v485
      %v627 = vmul.f32 %v488, %v488
      %v628 = vmul.f32 %v493, %v493
      %v629 = vmul.f32 %v496, %v496
      %v630 = vmul.f32 %v501, %v501
      %v631 = vmul.f32 %v504, %v504
      %v632 = vmul.f32 %v509, %v509
      %v633 = vmul.f32 %v512, %v512
      %v634 = vmul.f32 %v517, %v517
      %v635 = vmul.f32 %v520, %v520
      %v636 = vmul.f32 %v525, %v525
      %v637 = vmul.f32 %v528, %v528
      %v638 = vmul.f32 %v533, %v533
      %v639 = vmul.f32 %v536, %v536
      %v640 = vadd.f32 %v608, %v609
      %v641 = vadd.f32 %v640, %v610
      %v642 = vadd.f32 %v641, %v611
      %v643 = vadd.f32 %v642, %v612
      %v644 = vadd.f32 %v643, %v613
      %v645 = vadd.f32 %v644, %v614
      %v646 = vadd.f32 %v645, %v615
      %v647 = vadd.f32 %v646, %v616
      %v648 = vadd.f32 %v647, %v617
      %v649 = vadd.f32 %v648, %v618
      %v650 = vadd.f32 %v649, %v619
      %v651 = vadd.f32 %v650, %v620
      %v652 = vadd.f32 %v651, %v621
      %v653 = vadd.f32 %v652, %v622
      %v654 = vadd.f32 %v653, %v623
      %v655 = vadd.f32 %v654, %v624
      %v656 = vadd.f32 %v655, %v625
      %v657 = vadd.f32 %v656, %v626
      %v658 = vadd.f32 %v657, %v627
      %v659 = vadd.f32 %v658, %v628
      %v660 = vadd.f32 %v659, %v629
      %v661 = vadd.f32 %v660, %v630
      %v662 = vadd.f32 %v661, %v631
      %v663 = vadd.f32 %v662, %v632
      %v664 = vadd.f32 %v663, %v633
      %v665 = vadd.f32 %v664, %v634
      %v666 = vadd.f32 %v665, %v635
      %v667 = vadd.f32 %v666, %v636
      %v668 = vadd.f32 %v667, %v637
      %v669 = vadd.f32 %v668, %v638
      %v670 = vadd.f32 %v669, %v639
      %v671 = vrot.slane %v670, 4
      %v672 = vadd.f32 %v670, %v671
      %v673 = vrot.slane %v672, 2
      %v674 = vadd.f32 %v672, %v673
      %v675 = vrot.slane %v674, 1
      %v676 = vadd.f32 %v674, %v675
      %vm677 = vcmask 1040384
      %v678 = vsel %vm677, %v607, %v676
      %vm679 = vcmask 1041408
      %v680 = vsel %vm679, %v678, 0.0
      %681 = vst [vmem:[%s184] sm:$0xff] %v680
      %s682 = smul.u32 32, %s15
      %p683 = scmp.lt.s32.totalorder %s682, 63
      %s684 = scalar_select %p683, %s682, 63
      %s685 = smul.addr %s684, 8
      %s686 = scalar_lea.vmem %s2, %s685
      %p687 = scmp.lt.s32.totalorder %s15, 1
      %s688 = scalar_select %p687, %s15, 1
      %s689 = smul.addr %s688, 8
      %s690 = scalar_lea.vmem %s3, %s689
      // Predicated region
      $region29: #{basic_conv2d.2} parent=27 // pred_check
        %p691 = pneg %p80
      $region30: #{basic_conv2d.2} parent=27 // pred_check_branch
        %693 = sbr.rel (%p691) target = $region32
      $region31: #{basic_conv2d.2} parent=27 // pred_region
        %s694 = smul.u32 32, %s15
      $region32: #{basic_conv2d.2} parent=27 // pred_fallthru
        _
      // Predicated region
      $region33: #{basic_conv2d.2} parent=27 // pred_check
        %p695 = pneg %p106
      $region34: #{basic_conv2d.2} parent=27 // pred_check_branch
        %697 = sbr.rel (%p695) target = $region36
      $region35: #{basic_conv2d.2} parent=27 // pred_region
        _
      $region36: #{basic_conv2d.2} parent=27 // pred_fallthru
        _
    $region28: #{basic_conv2d.2} parent=5 // pred_fallthru
      _
    %p698 = scmp.le.s32.totalorder 2, %s10
    // Predicated region
    $region37: #{basic_conv2d.2} parent=5 // pred_check
      %p699 = pneg %p698
    $region38: #{basic_conv2d.2} parent=5 // pred_check_branch
      %701 = sbr.rel (%p699) target = $region40
    $region39: #{basic_conv2d.2} parent=5 // pred_region
      %s702 = ssub.s32 %s10, 2
      // Predicated region
      $region41: #{basic_conv2d.2} parent=39 // pred_check
        %p703 = pneg %p86
      $region42: #{basic_conv2d.2} parent=39 // pred_check_branch
        %705 = sbr.rel (%p703) target = $region44
      $region43: #{basic_conv2d.2} parent=39 // pred_region
        %s706 = smul.u32 32, %s16
        %p707 = scmp.lt.s32.totalorder %s706, 63
        %s708 = scalar_select %p707, %s706, 63
        %s709 = smul.addr %s708, 8
        %s710 = scalar_lea.vmem %s2, %s709
      $region44: #{basic_conv2d.2} parent=39 // pred_fallthru
        _
      // Predicated region
      $region45: #{basic_conv2d.2} parent=39 // pred_check
        %p711 = pneg %p112
      $region46: #{basic_conv2d.2} parent=39 // pred_check_branch
        %713 = sbr.rel (%p711) target = $region48
      $region47: #{basic_conv2d.2} parent=39 // pred_region
        %p714 = scmp.lt.s32.totalorder %s16, 1
        %s715 = scalar_select %p714, %s16, 1
        %s716 = smul.addr %s715, 8
        %s717 = scalar_lea.vmem %s3, %s716
      $region48: #{basic_conv2d.2} parent=39 // pred_fallthru
        _
    $region40: #{basic_conv2d.2} parent=5 // pred_fallthru
      _
  $region6: #{basic_conv2d.2} parent=0 // loop_footer
    %s14 = sadd.s32 1, %s10
  $region7: #{basic_conv2d.2} parent=0 // loop_footer_branch
    %9 = sbr.rel target = $region3
  $region8: #{basic_conv2d.2} parent=0 // loop_exit
    _

</llo_original>
